<compile_context>
chip_gen: v6e
topology: v6e:2x2x1
jax: 0.10.0
libtpu: 0.0.40
codegen_flags: <defaults>
</compile_context>

<pallas_src>
import functools

import jax
import jax.numpy as jnp
from jax.experimental import pallas as pl
from jax.experimental.pallas import tpu as pltpu

EPS = 1e-5                      # torch.nn.BatchNorm1d default eps
LANE = 128                      # pad feature dims to multiples of the lane width
VMEM_LIMIT = 48 * 1024 * 1024   # explicit scoped-VMEM budget (safe on v5e/v6e/v7x)


# ----------------------------------------------------------------------------
# helpers
# ----------------------------------------------------------------------------
def _pad_to(n, m):
    return ((n + m - 1) // m) * m


def _pick_batch_tile(batch, target=256):
    """Largest tile <= target that divides batch and keeps (8,128) tiling legal."""
    if batch <= target:
        return batch
    for t in range(target, 7, -1):
        if batch % t == 0 and t % 8 == 0:
            return t
    return batch  # fall back to a single whole-batch tile


def _full_spec(shape):
    return pl.BlockSpec(shape, lambda i: (0, 0))


def _tile_spec(tb, feat):
    return pl.BlockSpec((tb, feat), lambda i: (i, 0))


def _cost(batch, k, n, rsqrts=0):
    return pl.CostEstimate(
        flops=2 * batch * k * n + 8 * batch * n,
        transcendentals=rsqrts,
        bytes_accessed=4 * batch * k + 2 * k * n + 4 * batch * n + 16 * n,
    )


# ----------------------------------------------------------------------------
# kernels
# ----------------------------------------------------------------------------
def _head_kernel(x_ref, w_ref, b_ref, y_ref, s1_ref, s2_ref):
    """First hidden Linear; accumulates per-feature sum / sum-of-squares."""
    @pl.when(pl.program_id(0) == 0)
    def _():
        s1_ref[...] = jnp.zeros_like(s1_ref)
        s2_ref[...] = jnp.zeros_like(s2_ref)

    y = jnp.dot(x_ref[...].astype(jnp.bfloat16), w_ref[...],
                preferred_element_type=jnp.float32) + b_ref[...]
    y_ref[...] = y
    s1_ref[...] += jnp.sum(y, axis=0, keepdims=True)
    s2_ref[...] += jnp.sum(y * y, axis=0, keepdims=True)


def _mid_kernel(inv_n, y_ref, s1_ref, s2_ref, g_ref, bt_ref, w_ref, b_ref,
                yo_ref, o1_ref, o2_ref):
    """BatchNorm+ReLU of the previous layer fused with the next hidden Linear."""
    @pl.when(pl.program_id(0) == 0)
    def _():
        o1_ref[...] = jnp.zeros_like(o1_ref)
        o2_ref[...] = jnp.zeros_like(o2_ref)

    mean = s1_ref[...] * inv_n
    var = s2_ref[...] * inv_n - mean * mean
    scale = g_ref[...] * jax.lax.rsqrt(var + EPS)        # fused BN affine (1, h)
    shift = bt_ref[...] - mean * scale
    x = jnp.maximum(y_ref[...] * scale + shift, 0.0)     # 2 full-tile VPU ops + ReLU

    y = jnp.dot(x.astype(jnp.bfloat16), w_ref[...],
                preferred_element_type=jnp.float32) + b_ref[...]
    yo_ref[...] = y
    o1_ref[...] += jnp.sum(y, axis=0, keepdims=True)
    o2_ref[...] += jnp.sum(y * y, axis=0, keepdims=True)


def _tail_kernel(inv_n, y_ref, s1_ref, s2_ref, g_ref, bt_ref, w_ref, b_ref, o_ref):
    """BatchNorm+ReLU of the last hidden layer fused with the final Linear."""
    mean = s1_ref[...] * inv_n
    var = s2_ref[...] * inv_n - mean * mean
    scale = g_ref[...] * jax.lax.rsqrt(var + EPS)
    shift = bt_ref[...] - mean * scale
    x = jnp.maximum(y_ref[...] * scale + shift, 0.0)
    o_ref[...] = jnp.dot(x.astype(jnp.bfloat16), w_ref[...],
                         preferred_element_type=jnp.float32) + b_ref[...]


def _linear_kernel(x_ref, w_ref, b_ref, o_ref):
    """Plain Linear (used when hidden_dims is empty)."""
    o_ref[...] = jnp.dot(x_ref[...].astype(jnp.bfloat16), w_ref[...],
                         preferred_element_type=jnp.float32) + b_ref[...]


# ----------------------------------------------------------------------------
# pallas_call wrappers
# ----------------------------------------------------------------------------
def _call_head(x, w, b, tb, batch):
    in_pad, h_pad = w.shape
    nb = batch // tb
    return pl.pallas_call(
        _head_kernel,
        grid=(nb,),
        in_specs=[_tile_spec(tb, in_pad), _full_spec(w.shape), _full_spec(b.shape)],
        out_specs=[_tile_spec(tb, h_pad),
                   _full_spec((1, h_pad)), _full_spec((1, h_pad))],
        out_shape=[jax.ShapeDtypeStruct((batch, h_pad), jnp.float32),
                   jax.ShapeDtypeStruct((1, h_pad), jnp.float32),
                   jax.ShapeDtypeStruct((1, h_pad), jnp.float32)],
        compiler_params=pltpu.CompilerParams(
            dimension_semantics=("arbitrary",), vmem_limit_bytes=VMEM_LIMIT),
        cost_estimate=_cost(batch, in_pad, h_pad),
    )(x, w, b)


def _call_mid(y, s1, s2, g, bt, w, b, tb, batch, inv_n):
    k_pad, h_pad = w.shape
    nb = batch // tb
    kernel = functools.partial(_mid_kernel, inv_n)
    return pl.pallas_call(
        kernel,
        grid=(nb,),
        in_specs=[_tile_spec(tb, k_pad),
                  _full_spec(s1.shape), _full_spec(s2.shape),
                  _full_spec(g.shape), _full_spec(bt.shape),
                  _full_spec(w.shape), _full_spec(b.shape)],
        out_specs=[_tile_spec(tb, h_pad),
                   _full_spec((1, h_pad)), _full_spec((1, h_pad))],
        out_shape=[jax.ShapeDtypeStruct((batch, h_pad), jnp.float32),
                   jax.ShapeDtypeStruct((1, h_pad), jnp.float32),
                   jax.ShapeDtypeStruct((1, h_pad), jnp.float32)],
        compiler_params=pltpu.CompilerParams(
            dimension_semantics=("arbitrary",), vmem_limit_bytes=VMEM_LIMIT),
        cost_estimate=_cost(batch, k_pad, h_pad, rsqrts=nb * k_pad),
    )(y, s1, s2, g, bt, w, b)


def _call_tail(y, s1, s2, g, bt, w, b, tb, batch, inv_n):
    k_pad, n_pad = w.shape
    nb = batch // tb
    kernel = functools.partial(_tail_kernel, inv_n)
    return pl.pallas_call(
        kernel,
        grid=(nb,),
        in_specs=[_tile_spec(tb, k_pad),
                  _full_spec(s1.shape), _full_spec(s2.shape),
                  _full_spec(g.shape), _full_spec(bt.shape),
                  _full_spec(w.shape), _full_spec(b.shape)],
        out_specs=_tile_spec(tb, n_pad),
        out_shape=jax.ShapeDtypeStruct((batch, n_pad), jnp.float32),
        compiler_params=pltpu.CompilerParams(
            dimension_semantics=("parallel",), vmem_limit_bytes=VMEM_LIMIT),
        cost_estimate=_cost(batch, k_pad, n_pad, rsqrts=nb * k_pad),
    )(y, s1, s2, g, bt, w, b)


def _call_linear(x, w, b, tb, batch):
    in_pad, n_pad = w.shape
    nb = batch // tb
    return pl.pallas_call(
        _linear_kernel,
        grid=(nb,),
        in_specs=[_tile_spec(tb, in_pad), _full_spec(w.shape), _full_spec(b.shape)],
        out_specs=_tile_spec(tb, n_pad),
        out_shape=jax.ShapeDtypeStruct((batch, n_pad), jnp.float32),
        compiler_params=pltpu.CompilerParams(
            dimension_semantics=("parallel",), vmem_limit_bytes=VMEM_LIMIT),
        cost_estimate=_cost(batch, in_pad, n_pad),
    )(x, w, b)


# ----------------------------------------------------------------------------
# public forward
# ----------------------------------------------------------------------------
def mlp_forward(x, hidden_params, final_params, block_b=256):
    batch, in_dim = x.shape
    tb = _pick_batch_tile(batch, block_b)
    inv_n = 1.0 / float(batch)

    # Pad input features to a lane multiple (zeros don't change x @ W).
    in_pad = _pad_to(in_dim, LANE)
    x_p = jnp.pad(x.astype(jnp.float32), ((0, 0), (0, in_pad - in_dim)))

    # Pre-pad / pre-cast parameters once: weights -> bf16 (MXU), bias / BN
    # affine -> f32 (VPU).  Padded gamma/beta/bias are zero, so padded columns
    # stay exactly zero through BN+ReLU and the next matmul.
    hidden_p = []
    cur = in_pad
    for (w, b, g, beta) in hidden_params:
        k, h = w.shape
        h_pad = _pad_to(h, LANE)
        w_p = jnp.pad(w, ((0, cur - k), (0, h_pad - h))).astype(jnp.bfloat16)
        b_p = jnp.pad(b, ((0, 0), (0, h_pad - h))).astype(jnp.float32)
        g_p = jnp.pad(g, ((0, 0), (0, h_pad - h))).astype(jnp.float32)
        bt_p = jnp.pad(beta, ((0, 0), (0, h_pad - h))).astype(jnp.float32)
        hidden_p.append((w_p, b_p, g_p, bt_p))
        cur = h_pad

    wf, bf = final_params
    k, out_dim = wf.shape
    out_pad = _pad_to(out_dim, LANE)
    wf_p = jnp.pad(wf, ((0, cur - k), (0, out_pad - out_dim))).astype(jnp.bfloat16)
    bf_p = jnp.pad(bf, ((0, 0), (0, out_pad - out_dim))).astype(jnp.float32)

    if not hidden_p:
        out = _call_linear(x_p, wf_p, bf_p, tb, batch)
        return out[:, :out_dim]

    w0, b0, g_prev, bt_prev = hidden_p[0]
    y, s1, s2 = _call_head(x_p, w0, b0, tb, batch)
    for (w, b, g, beta) in hidden_p[1:]:
        y, s1, s2 = _call_mid(y, s1, s2, g_prev, bt_prev, w, b, tb, batch, inv_n)
        g_prev, bt_prev = g, beta
    out = _call_tail(y, s1, s2, g_prev, bt_prev, wf_p, bf_p, tb, batch, inv_n)
    return out[:, :out_dim]


# ----------------------------------------------------------------------------
# init + pure-JAX reference (f32, mirrors the torch module's forward)
# ----------------------------------------------------------------------------
def init_params(key, input_dim, hidden_dims, output_dim):
    """Deterministic init mirroring torch.nn.Linear's U(-1/sqrt(fan_in), +...)."""
    hidden_params = []
    in_dim = input_dim
    for h in hidden_dims:
        key, k1, k2 = jax.random.split(key, 3)
        bound = 1.0 / float(jnp.sqrt(in_dim))
        w = jax.random.uniform(k1, (in_dim, h), jnp.float32, -bound, bound)
        b = jax.random.uniform(k2, (1, h), jnp.float32, -bound, bound)
        g = jnp.ones((1, h), jnp.float32)       # BatchNorm weight
        beta = jnp.zeros((1, h), jnp.float32)   # BatchNorm bias
        hidden_params.append((w, b, g, beta))
        in_dim = h
    key, k1, k2 = jax.random.split(key, 3)
    bound = 1.0 / float(jnp.sqrt(in_dim))
    w = jax.random.uniform(k1, (in_dim, output_dim), jnp.float32, -bound, bound)
    b = jax.random.uniform(k2, (1, output_dim), jnp.float32, -bound, bound)
    return hidden_params, (w, b)


def mlp_reference(x, hidden_params, final_params):
    for w, b, g, beta in hidden_params:
        y = x @ w + b
        mean = y.mean(axis=0, keepdims=True)
        var = ((y - mean) ** 2).mean(axis=0, keepdims=True)
        y = (y - mean) / jnp.sqrt(var + EPS) * g + beta
        x = jnp.maximum(y, 0.0)
    w, b = final_params
    return x @ w + b


if __name__ == "__main__":
    batch = 128
    input_dim = 32
    hidden_dims = (64, 32)
    output_dim = 16

    key = jax.random.PRNGKey(0)
    key, xk = jax.random.split(key)
    x = jax.random.normal(xk, (batch, input_dim), jnp.float32)

    hidden_params, final_params = init_params(key, input_dim, hidden_dims, output_dim)

    out = mlp_forward(x, hidden_params, final_params, block_b=64)  # 2 batch tiles
    out = jax.block_until_ready(out)

    ref = mlp_reference(x, hidden_params, final_params)
    assert out.shape == (batch, output_dim)
    # bf16 MXU inputs (f32 accumulation) => relaxed tolerance vs the f32 reference.
    assert jnp.allclose(out, ref, atol=5e-2, rtol=5e-2), "kernel mismatch vs reference"
    print("KERNEL_OK")
</pallas_src>

<mosaic_0001>
module attributes {stable_mosaic.version = 11 : i64} {
  func.func @_head_kernel(%arg0: i32, %arg1: memref<64x128xf32, #tpu.memory_space<vmem>>, %arg2: memref<128x128xbf16, #tpu.memory_space<vmem>>, %arg3: memref<1x128xf32, #tpu.memory_space<vmem>>, %arg4: memref<64x128xf32, #tpu.memory_space<vmem>>, %arg5: memref<1x128xf32, #tpu.memory_space<vmem>>, %arg6: memref<1x128xf32, #tpu.memory_space<vmem>>) attributes {dimension_semantics = [#tpu.dimension_semantics<arbitrary>], iteration_bounds = array<i64: 2>, scalar_prefetch = 0 : i64, scratch_operands = 0 : i64, tpu.core_type = #tpu.core_type<tc>, window_params = [{transform_indices = @transform_0, window_bounds = array<i64: 64, 128>}, {pipeline_mode = #tpu.pipeline_mode<synchronous>, transform_indices = @transform_1, window_bounds = array<i64: 128, 128>}, {pipeline_mode = #tpu.pipeline_mode<synchronous>, transform_indices = @transform_2, window_bounds = array<i64: 1, 128>}, {transform_indices = @transform_3, window_bounds = array<i64: 64, 128>}, {pipeline_mode = #tpu.pipeline_mode<synchronous>, transform_indices = @transform_4, window_bounds = array<i64: 1, 128>}, {pipeline_mode = #tpu.pipeline_mode<synchronous>, transform_indices = @transform_5, window_bounds = array<i64: 1, 128>}]} {
    %c0_i32 = arith.constant 0 : i32
    %0 = arith.cmpi eq, %arg0, %c0_i32 : i32
    %1 = arith.extui %0 : i1 to i32
    %c0_i32_0 = arith.constant 0 : i32
    %2 = arith.cmpi ne, %1, %c0_i32_0 : i32
    scf.if %2 {
      %cst_18 = arith.constant 0.000000e+00 : f32
      %22 = vector.broadcast %cst_18 : f32 to vector<1x128xf32>
      %c0_19 = arith.constant 0 : index
      %c0_20 = arith.constant 0 : index
      %23 = vector.load %arg5[%c0_19, %c0_20] : memref<1x128xf32, #tpu.memory_space<vmem>>, vector<1x128xf32>
      tpu.vector_store %arg5[%c0_19, %c0_20], %22 {strides = array<i32>} : memref<1x128xf32, #tpu.memory_space<vmem>>, vector<1x128xf32>,
      %cst_21 = arith.constant 0.000000e+00 : f32
      %24 = vector.broadcast %cst_21 : f32 to vector<1x128xf32>
      %c0_22 = arith.constant 0 : index
      %c0_23 = arith.constant 0 : index
      %25 = vector.load %arg6[%c0_22, %c0_23] : memref<1x128xf32, #tpu.memory_space<vmem>>, vector<1x128xf32>
      tpu.vector_store %arg6[%c0_22, %c0_23], %24 {strides = array<i32>} : memref<1x128xf32, #tpu.memory_space<vmem>>, vector<1x128xf32>,
    } else {
    }
    %c0 = arith.constant 0 : index
    %c0_1 = arith.constant 0 : index
    %3 = vector.load %arg1[%c0, %c0_1] : memref<64x128xf32, #tpu.memory_space<vmem>>, vector<64x128xf32>
    %4 = arith.truncf %3 : vector<64x128xf32> to vector<64x128xbf16>
    %c0_2 = arith.constant 0 : index
    %c0_3 = arith.constant 0 : index
    %5 = vector.load %arg2[%c0_2, %c0_3] : memref<128x128xbf16, #tpu.memory_space<vmem>>, vector<128x128xbf16>
    %cst = arith.constant dense<0.000000e+00> : vector<64x128xf32>
    %6 = tpu.matmul %4, %5, %cst {dimension_numbers = #tpu.dot_dimension_numbers<[1], [0], [0], [1], [0, 0, 1, 1], [], []>} : vector<64x128xbf16>, vector<128x128xbf16>, vector<64x128xf32> -> vector<64x128xf32>
    %c0_4 = arith.constant 0 : index
    %c0_5 = arith.constant 0 : index
    %7 = vector.load %arg3[%c0_4, %c0_5] : memref<1x128xf32, #tpu.memory_space<vmem>>, vector<1x128xf32>
    %8 = vector.broadcast %7 : vector<1x128xf32> to vector<64x128xf32>
    %9 = arith.addf %6, %8 : vector<64x128xf32>
    %c0_6 = arith.constant 0 : index
    %c0_7 = arith.constant 0 : index
    %10 = vector.load %arg4[%c0_6, %c0_7] : memref<64x128xf32, #tpu.memory_space<vmem>>, vector<64x128xf32>
    tpu.vector_store %arg4[%c0_6, %c0_7], %9 {strides = array<i32>} : memref<64x128xf32, #tpu.memory_space<vmem>>, vector<64x128xf32>,
    %c0_8 = arith.constant 0 : index
    %c0_9 = arith.constant 0 : index
    %11 = vector.load %arg5[%c0_8, %c0_9] : memref<1x128xf32, #tpu.memory_space<vmem>>, vector<1x128xf32>
    %cst_10 = arith.constant dense<0.000000e+00> : vector<128xf32>
    %12 = vector.multi_reduction <add>, %9, %cst_10 [0] : vector<64x128xf32> to vector<128xf32>
    %13 = vector.shape_cast %12 : vector<128xf32> to vector<1x128xf32>
    %14 = arith.addf %11, %13 : vector<1x128xf32>
    %c0_11 = arith.constant 0 : index
    %c0_12 = arith.constant 0 : index
    %15 = vector.load %arg5[%c0_11, %c0_12] : memref<1x128xf32, #tpu.memory_space<vmem>>, vector<1x128xf32>
    tpu.vector_store %arg5[%c0_11, %c0_12], %14 {strides = array<i32>} : memref<1x128xf32, #tpu.memory_space<vmem>>, vector<1x128xf32>,
    %c0_13 = arith.constant 0 : index
    %c0_14 = arith.constant 0 : index
    %16 = vector.load %arg6[%c0_13, %c0_14] : memref<1x128xf32, #tpu.memory_space<vmem>>, vector<1x128xf32>
    %17 = arith.mulf %9, %9 : vector<64x128xf32>
    %cst_15 = arith.constant dense<0.000000e+00> : vector<128xf32>
    %18 = vector.multi_reduction <add>, %17, %cst_15 [0] : vector<64x128xf32> to vector<128xf32>
    %19 = vector.shape_cast %18 : vector<128xf32> to vector<1x128xf32>
    %20 = arith.addf %16, %19 : vector<1x128xf32>
    %c0_16 = arith.constant 0 : index
    %c0_17 = arith.constant 0 : index
    %21 = vector.load %arg6[%c0_16, %c0_17] : memref<1x128xf32, #tpu.memory_space<vmem>>, vector<1x128xf32>
    tpu.vector_store %arg6[%c0_16, %c0_17], %20 {strides = array<i32>} : memref<1x128xf32, #tpu.memory_space<vmem>>, vector<1x128xf32>,
    return
  }
  func.func @transform_0(%arg0: i32) -> (i32, i32) {
    %c0_i32 = arith.constant 0 : i32
    %c0_i32_0 = arith.constant 0 : i32
    return %arg0, %c0_i32 : i32, i32
  }
  func.func @transform_1(%arg0: i32) -> (i32, i32) {
    %c0_i32 = arith.constant 0 : i32
    %c0_i32_0 = arith.constant 0 : i32
    %c0_i32_1 = arith.constant 0 : i32
    return %c0_i32, %c0_i32_0 : i32, i32
  }
  func.func @transform_2(%arg0: i32) -> (i32, i32) {
    %c0_i32 = arith.constant 0 : i32
    %c0_i32_0 = arith.constant 0 : i32
    %c0_i32_1 = arith.constant 0 : i32
    return %c0_i32, %c0_i32_0 : i32, i32
  }
  func.func @transform_3(%arg0: i32) -> (i32, i32) {
    %c0_i32 = arith.constant 0 : i32
    %c0_i32_0 = arith.constant 0 : i32
    return %arg0, %c0_i32 : i32, i32
  }
  func.func @transform_4(%arg0: i32) -> (i32, i32) {
    %c0_i32 = arith.constant 0 : i32
    %c0_i32_0 = arith.constant 0 : i32
    %c0_i32_1 = arith.constant 0 : i32
    return %c0_i32, %c0_i32_0 : i32, i32
  }
  func.func @transform_5(%arg0: i32) -> (i32, i32) {
    %c0_i32 = arith.constant 0 : i32
    %c0_i32_0 = arith.constant 0 : i32
    %c0_i32_1 = arith.constant 0 : i32
    return %c0_i32, %c0_i32_0 : i32, i32
  }
}

</mosaic_0001>

<llo_original>
// kernel: tpu_custom_call.1
$region0: #{tpu_custom_call.1}
  #allocation0 [shape = 'u32[]', space=smem, size = 0x4, offset = 0x4, fixed_abs, tag = 'smem constant byte address 0x4 - core index']
  #allocation1 [shape = 'u32[144,128]{1,0:T(1,128)}', space=vmem, size = 0x12000, scoped, tag = 'internal scratch']
  %s0 = inlined_call_operand.hbm [shape: f32[128,128], index: 0, kind: input, shape index: {}]
  %s1 = inlined_call_operand.hbm [shape: bf16[128,128], index: 1, kind: input, shape index: {}]
  %s2 = inlined_call_operand.vmem [shape: f32[1,128], index: 2, kind: input, shape index: {}]
  %s3 = inlined_call_operand.hbm [shape: f32[128,128], index: 3, kind: output, shape index: {0}]
  %s4 = inlined_call_operand.hbm [shape: f32[1,128], index: 4, kind: output, shape index: {1}]
  %s5 = inlined_call_operand.hbm [shape: f32[1,128], index: 5, kind: output, shape index: {2}]
  %6 = xla_tuple %s3, %s4, %s5
  %s7 = sld [smem:[#allocation0]]
  $region73: #{tpu_custom_call.1} parent=0
    _
  %s9 = ssub.s32 1, %s7
  %s10 = scalar_select 0, %s9, %s7
  $region1: #{tpu_custom_call.1} parent=0
    #allocation2 [shape = 'u8[65536]{0}', space=vmem, size = 0x10000, scoped, tag = 'input window, operand 0']
    #allocation3 [shape = 's32[2]{0}', space=sflag, size = 0x8, scoped, tag = 'scoped memory for tpu_custom_call.1']
    #allocation4 [shape = 's32[2]{0}', space=sflag, size = 0x8, scoped, tag = 'scoped memory for tpu_custom_call.1']
    #allocation5 [shape = 'u8[32768]{0}', space=vmem, size = 0x8000, scoped, tag = 'input window, operand 1, single buffered']
    #allocation6 [shape = 's32[1]{0}', space=sflag, size = 0x4, scoped, tag = 'scoped memory for tpu_custom_call.1']
    #allocation7 [shape = 'u8[65536]{0}', space=vmem, size = 0x10000, scoped, tag = 'output window, operand 0']
    #allocation8 [shape = 'u8[512]{0}', space=vmem, size = 0x400, scoped, tag = 'output window, operand 1, single buffered']
    #allocation9 [shape = 's32[1]{0}', space=sflag, size = 0x4, scoped, tag = 'scoped memory for tpu_custom_call.1']
    #allocation10 [shape = 'u8[512]{0}', space=vmem, size = 0x400, scoped, tag = 'output window, operand 2, single buffered']
    %11 = vsyncpa [#allocation3], 0
    %s12 = scalar_lea.sflag [#allocation3], 1
    %13 = vsyncpa %s12, 0
    %14 = vsyncpa [#allocation6], 0
    %15 = vsyncpa [#allocation4], 0
    %s16 = scalar_lea.sflag [#allocation4], 1
    %17 = vsyncpa %s16, 0
    %18 = vsyncpa [#allocation9], 0
    loop: start=0, step=1, limit=4
    $region2: #{tpu_custom_call.1} parent=1 // loop_pre_header
      _
    $region3: #{tpu_custom_call.1} parent=1 // loop_header
      %s20 = sphi 0, %s24
      %p21 = scmp.ge.s32.totalorder %s20, 4
      %s30 = sphi 0, %s32
      %s33 = sphi 0, %s30
      %s34 = sphi 0, %s33
      %s50 = sphi 0, %s34
      %s54 = sphi 0, %s54
      %s56 = sphi 0, %s54
      %s57 = sphi 0, %s56
      %s71 = sphi 0, %s57
      %s75 = sphi 0, %s75
      %s77 = sphi 0, %s75
      %s78 = sphi 0, %s77
      %s92 = sphi 0, %s78
      %s98 = sphi 0, %s100
      %s101 = sphi 0, %s98
      %s102 = sphi 0, %s101
      %s118 = sphi 0, %s102
      %s122 = sphi 0, %s122
      %s124 = sphi 0, %s122
      %s125 = sphi 0, %s124
      %s139 = sphi 0, %s125
      %s143 = sphi 0, %s143
      %s145 = sphi 0, %s143
      %s146 = sphi 0, %s145
      %s160 = sphi 0, %s146
    $region4: #{tpu_custom_call.1} parent=1 // loop_header_branch
      %23 = sbr.rel (%p21) target = $region8
    $region5: #{tpu_custom_call.1} parent=1 // loop_body
      %s25 = ssub.s32 %s20, 1
      %s26 = ssub.s32 %s20, 2
      %s27 = sadd.s32 %s20, 1
      %s28 = ssub.s32 %s20, %s27
      %p29 = scmp.eq.s32.totalorder %s28, 0
      %s31 = sadd.s32 %s30, 1
      %s32 = scalar_select %p29, %s30, %s31
      %p35 = pneg %p29
      %p36 = scmp.eq.s32.totalorder %s20, 1
      %p37 = por %p35, %p36
      %p38 = scmp.ne.s32.totalorder %s30, %s33
      %p39 = scmp.eq.s32.totalorder %s20, 0
      %p40 = por %p38, %p39
      %p41 = scmp.ne.s32.totalorder %s30, %s33
      %p42 = scmp.eq.s32.totalorder %s25, 1
      %p43 = por %p41, %p42
      %p44 = scmp.ne.s32.totalorder %s33, %s34
      %p45 = scmp.eq.s32.totalorder %s25, 0
      %p46 = por %p44, %p45
      %p47 = scmp.ne.s32.totalorder %s33, %s34
      %p48 = scmp.eq.s32.totalorder %s26, 1
      %p49 = por %p47, %p48
      %p51 = scmp.ne.s32.totalorder %s34, %s50
      %p52 = scmp.eq.s32.totalorder %s26, 0
      %p53 = por %p51, %p52
      %s55 = sadd.s32 %s54, 1
      %p58 = scmp.eq.s32.totalorder %s20, 1
      %p59 = scmp.ne.s32.totalorder %s54, %s56
      %p60 = scmp.eq.s32.totalorder %s20, 0
      %p61 = por %p59, %p60
      %p62 = scmp.ne.s32.totalorder %s54, %s56
      %p63 = scmp.eq.s32.totalorder %s25, 1
      %p64 = por %p62, %p63
      %p65 = scmp.ne.s32.totalorder %s56, %s57
      %p66 = scmp.eq.s32.totalorder %s25, 0
      %p67 = por %p65, %p66
      %p68 = scmp.ne.s32.totalorder %s56, %s57
      %p69 = scmp.eq.s32.totalorder %s26, 1
      %p70 = por %p68, %p69
      %p72 = scmp.ne.s32.totalorder %s57, %s71
      %p73 = scmp.eq.s32.totalorder %s26, 0
      %p74 = por %p72, %p73
      %s76 = sadd.s32 %s75, 1
      %p79 = scmp.eq.s32.totalorder %s20, 1
      %p80 = scmp.ne.s32.totalorder %s75, %s77
      %p81 = scmp.eq.s32.totalorder %s20, 0
      %p82 = por %p80, %p81
      %p83 = scmp.ne.s32.totalorder %s75, %s77
      %p84 = scmp.eq.s32.totalorder %s25, 1
      %p85 = por %p83, %p84
      %p86 = scmp.ne.s32.totalorder %s77, %s78
      %p87 = scmp.eq.s32.totalorder %s25, 0
      %p88 = por %p86, %p87
      %p89 = scmp.ne.s32.totalorder %s77, %s78
      %p90 = scmp.eq.s32.totalorder %s26, 1
      %p91 = por %p89, %p90
      %p93 = scmp.ne.s32.totalorder %s78, %s92
      %p94 = scmp.eq.s32.totalorder %s26, 0
      %p95 = por %p93, %p94
      %s96 = ssub.s32 %s20, %s27
      %p97 = scmp.eq.s32.totalorder %s96, 0
      %s99 = sadd.s32 %s98, 1
      %s100 = scalar_select %p97, %s98, %s99
      %p103 = pneg %p97
      %p104 = scmp.eq.s32.totalorder %s20, 1
      %p105 = por %p103, %p104
      %p106 = scmp.ne.s32.totalorder %s98, %s101
      %p107 = scmp.eq.s32.totalorder %s20, 0
      %p108 = por %p106, %p107
      %p109 = scmp.ne.s32.totalorder %s98, %s101
      %p110 = scmp.eq.s32.totalorder %s25, 1
      %p111 = por %p109, %p110
      %p112 = scmp.ne.s32.totalorder %s101, %s102
      %p113 = scmp.eq.s32.totalorder %s25, 0
      %p114 = por %p112, %p113
      %p115 = scmp.ne.s32.totalorder %s101, %s102
      %p116 = scmp.eq.s32.totalorder %s26, 1
      %p117 = por %p115, %p116
      %p119 = scmp.ne.s32.totalorder %s102, %s118
      %p120 = scmp.eq.s32.totalorder %s26, 0
      %p121 = por %p119, %p120
      %s123 = sadd.s32 %s122, 1
      %p126 = scmp.eq.s32.totalorder %s20, 1
      %p127 = scmp.ne.s32.totalorder %s122, %s124
      %p128 = scmp.eq.s32.totalorder %s20, 0
      %p129 = por %p127, %p128
      %p130 = scmp.ne.s32.totalorder %s122, %s124
      %p131 = scmp.eq.s32.totalorder %s25, 1
      %p132 = por %p130, %p131
      %p133 = scmp.ne.s32.totalorder %s124, %s125
      %p134 = scmp.eq.s32.totalorder %s25, 0
      %p135 = por %p133, %p134
      %p136 = scmp.ne.s32.totalorder %s124, %s125
      %p137 = scmp.eq.s32.totalorder %s26, 1
      %p138 = por %p136, %p137
      %p140 = scmp.ne.s32.totalorder %s125, %s139
      %p141 = scmp.eq.s32.totalorder %s26, 0
      %p142 = por %p140, %p141
      %s144 = sadd.s32 %s143, 1
      %p147 = scmp.eq.s32.totalorder %s20, 1
      %p148 = scmp.ne.s32.totalorder %s143, %s145
      %p149 = scmp.eq.s32.totalorder %s20, 0
      %p150 = por %p148, %p149
      %p151 = scmp.ne.s32.totalorder %s143, %s145
      %p152 = scmp.eq.s32.totalorder %s25, 1
      %p153 = por %p151, %p152
      %p154 = scmp.ne.s32.totalorder %s145, %s146
      %p155 = scmp.eq.s32.totalorder %s25, 0
      %p156 = por %p154, %p155
      %p157 = scmp.ne.s32.totalorder %s145, %s146
      %p158 = scmp.eq.s32.totalorder %s26, 1
      %p159 = por %p157, %p158
      %p161 = scmp.ne.s32.totalorder %s146, %s160
      %p162 = scmp.eq.s32.totalorder %s26, 0
      %p163 = por %p161, %p162
      %p164 = scmp.le.s32.totalorder 1, %s20
      %p165 = scmp.lt.s32.totalorder %s20, 3
      %p166 = pnand %p164, %p165
      %p167 = pneg %p166
      // Predicated region
      $region9: #{tpu_custom_call.1} parent=5 // pred_check
        _
      $region10: #{tpu_custom_call.1} parent=5 // pred_check_branch
        %169 = sbr.rel (%p166) target = $region12
      $region11: #{tpu_custom_call.1} parent=5 // pred_region
        %s170 = ssub.s32 %s20, 1
        // Predicated region
        $region13: #{tpu_custom_call.1} parent=11 // pred_check
          %p171 = pneg %p67
        $region14: #{tpu_custom_call.1} parent=11 // pred_check_branch
          %173 = sbr.rel (%p171) target = $region16
        $region15: #{tpu_custom_call.1} parent=11 // pred_region
          %s175 = ssub.s32 1024, 1024
          %176 = vsyncadd [#allocation6], %s175
          %s177 = sshll.u32 [#allocation5], 4
          %s178 = int_to_ptr.vmem [resolvable:$true] %s177
          %183 = dma.hbm_to_vmem [thread:$0]  %s1, 1024, %s178, [#allocation6], 64, 64, 4
        $region16: #{tpu_custom_call.1} parent=11 // pred_fallthru
          _
        // Predicated region
        $region17: #{tpu_custom_call.1} parent=11 // pred_check
          %p184 = pneg %p88
        $region18: #{tpu_custom_call.1} parent=11 // pred_check_branch
          %186 = sbr.rel (%p184) target = $region20
        $region19: #{tpu_custom_call.1} parent=11 // pred_region
          _
        $region20: #{tpu_custom_call.1} parent=11 // pred_fallthru
          _
      $region12: #{tpu_custom_call.1} parent=5 // pred_fallthru
        _
      %p187 = scmp.lt.s32.totalorder %s20, 2
      // Predicated region
      $region21: #{tpu_custom_call.1} parent=5 // pred_check
        %p188 = pneg %p187
      $region22: #{tpu_custom_call.1} parent=5 // pred_check_branch
        %190 = sbr.rel (%p188) target = $region24
      $region23: #{tpu_custom_call.1} parent=5 // pred_region
        // Predicated region
        $region25: #{tpu_custom_call.1} parent=23 // pred_check
          %p191 = pneg %p40
        $region26: #{tpu_custom_call.1} parent=23 // pred_check_branch
          %193 = sbr.rel (%p191) target = $region28
        $region27: #{tpu_custom_call.1} parent=23 // pred_region
          %s194 = sand.u32 %s30, 1
          %s195 = scalar_lea.sflag [#allocation3], %s194
          %s196 = sand.u32 %s30, 1
          %s197 = smul.addr %s196, 64
          %s198 = scalar_lea.vmem [#allocation2], %s197
          %s199 = smul.u32 8, %s20
          %s201 = ssub.s32 1024, 1024
          %202 = vsyncadd %s195, %s201
          %s203 = smul.addr %s199, 128
          %s204 = scalar_lea.hbm %s0, %s203
          %s205 = sshll.u32 %s198, 4
          %s206 = int_to_ptr.vmem [resolvable:$true] %s205
          %211 = dma.hbm_to_vmem [thread:$0]  %s204, 1024, %s206, %s195, 128, 128, 8
        $region28: #{tpu_custom_call.1} parent=23 // pred_fallthru
          _
      $region24: #{tpu_custom_call.1} parent=5 // pred_fallthru
        _
      %p212 = scmp.le.s32.totalorder 1, %s20
      %p213 = scmp.lt.s32.totalorder %s20, 3
      %p214 = pnand %p212, %p213
      %p215 = pneg %p214
      // Predicated region
      $region29: #{tpu_custom_call.1} parent=5 // pred_check
        _
      $region30: #{tpu_custom_call.1} parent=5 // pred_check_branch
        %217 = sbr.rel (%p214) target = $region32
      $region31: #{tpu_custom_call.1} parent=5 // pred_region
        %s218 = ssub.s32 %s20, 1
        %s219 = sand.u32 %s33, 1
        %s220 = scalar_lea.sflag [#allocation3], %s219
        %s221 = sand.u32 %s33, 1
        %s222 = smul.addr %s221, 64
        %s223 = scalar_lea.vmem [#allocation2], %s222
        // Predicated region
        $region33: #{tpu_custom_call.1} parent=31 // pred_check
          %p224 = pneg %p46
        $region34: #{tpu_custom_call.1} parent=31 // pred_check_branch
          %226 = sbr.rel (%p224) target = $region36
        $region35: #{tpu_custom_call.1} parent=31 // pred_region
          %227 = dma.done %s220, 1024
        $region36: #{tpu_custom_call.1} parent=31 // pred_fallthru
          _
        // Predicated region
        $region37: #{tpu_custom_call.1} parent=31 // pred_check
          %p228 = pneg %p67
        $region38: #{tpu_custom_call.1} parent=31 // pred_check_branch
          %230 = sbr.rel (%p228) target = $region40
        $region39: #{tpu_custom_call.1} parent=31 // pred_region
          %231 = dma.done [#allocation6], 1024
        $region40: #{tpu_custom_call.1} parent=31 // pred_fallthru
          _
        %s232 = sand.u32 %s33, 1
        %s233 = scalar_lea.sflag [#allocation3], %s232
        %s234 = sand.u32 %s33, 1
        %s235 = smul.addr %s234, 64
        %s236 = scalar_lea.vmem [#allocation2], %s235
        %p237 = pneg %p46
        %p238 = pneg %p43
        %p239 = pneg %p67
        %p240 = pneg %p64
        %p241 = pneg %p88
        %p242 = pneg %p85
        %p243 = pneg %p114
        %p244 = pneg %p111
        %s245 = sand.u32 %s101, 1
        %s246 = scalar_lea.sflag [#allocation4], %s245
        %s247 = sand.u32 %s101, 1
        %s248 = smul.addr %s247, 64
        %s249 = scalar_lea.vmem [#allocation7], %s248
        %p250 = pneg %p135
        %p251 = pneg %p132
        %p252 = pneg %p156
        %p253 = pneg %p153
        %s254 = smul.u32 8, %s25
        %s255 = smul.u32 8, %s25
        %p257 = scmp.eq.s32.totalorder %s25, 0
        // Predicated region
        $region41: #{tpu_custom_call.1} parent=31 // pred_check
          %p258 = pneg %p257
        $region42: #{tpu_custom_call.1} parent=31 // pred_check_branch
          %260 = sbr.rel (%p258) target = $region44
        $region43: #{tpu_custom_call.1} parent=31 // pred_region
          %261 = vst [vmem:[#allocation8] sm:$0x1] 0.0
          %262 = vst [vmem:[#allocation10] sm:$0x1] 0.0
        $region44: #{tpu_custom_call.1} parent=31 // pred_fallthru
          _
        %v263 = vld [vmem:[%s223] sm:$0xff]
        %v264 = vld [vmem:[%s223 + $0x8] sm:$0xff]
        %v265 = vld [vmem:[%s223 + $0x10] sm:$0xff]
        %v266 = vld [vmem:[%s223 + $0x18] sm:$0xff]
        %v267 = vld [vmem:[%s223 + $0x20] sm:$0xff]
        %v268 = vld [vmem:[%s223 + $0x28] sm:$0xff]
        %v269 = vld [vmem:[%s223 + $0x30] sm:$0xff]
        %v270 = vld [vmem:[%s223 + $0x38] sm:$0xff]
        %v271 = vpack.c.bf16 %v264, %v263
        %v272 = vpack.c.bf16 %v266, %v265
        %v273 = vpack.c.bf16 %v268, %v267
        %v274 = vpack.c.bf16 %v270, %v269
        %v275 = vld [vmem:[#allocation5] sm:$0xf]
        %v276 = vld [vmem:[#allocation5 + $0x4] sm:$0xf]
        %v277 = vld [vmem:[#allocation5 + $0x8] sm:$0xf]
        %v278 = vld [vmem:[#allocation5 + $0xc] sm:$0xf]
        %v279 = vld [vmem:[#allocation5 + $0x10] sm:$0xf]
        %v280 = vld [vmem:[#allocation5 + $0x14] sm:$0xf]
        %v281 = vld [vmem:[#allocation5 + $0x18] sm:$0xf]
        %v282 = vld [vmem:[#allocation5 + $0x1c] sm:$0xf]
        %v283 = vld [vmem:[#allocation5 + $0x20] sm:$0xf]
        %v284 = vld [vmem:[#allocation5 + $0x24] sm:$0xf]
        %v285 = vld [vmem:[#allocation5 + $0x28] sm:$0xf]
        %v286 = vld [vmem:[#allocation5 + $0x2c] sm:$0xf]
        %v287 = vld [vmem:[#allocation5 + $0x30] sm:$0xf]
        %v288 = vld [vmem:[#allocation5 + $0x34] sm:$0xf]
        %v289 = vld [vmem:[#allocation5 + $0x38] sm:$0xf]
        %v290 = vld [vmem:[#allocation5 + $0x3c] sm:$0xf]
        %v291 = vld [vmem:[%s2] sm:$0x1]
        %v293 = vlaneseq
        %v294 = vshrl.u32 %v293, 7
        %v295 = vsub.s32 0, %v294
        %v296 = vrot.slane %v291, %v295
        %v314 = vunpack.c.l.b16 %v275
        %v315 = vunpack.c.l.b16 %v276
        %v316 = vunpack.c.l.b16 %v277
        %v317 = vunpack.c.l.b16 %v278
        %v318 = vunpack.c.l.b16 %v279
        %v319 = vunpack.c.l.b16 %v280
        %v320 = vunpack.c.l.b16 %v281
        %v321 = vunpack.c.l.b16 %v282
        %v322 = vunpack.c.l.b16 %v283
        %v323 = vunpack.c.l.b16 %v284
        %v324 = vunpack.c.l.b16 %v285
        %v325 = vunpack.c.l.b16 %v286
        %v326 = vunpack.c.l.b16 %v287
        %v327 = vunpack.c.l.b16 %v288
        %v328 = vunpack.c.l.b16 %v289
        %v329 = vunpack.c.l.b16 %v290
        %v330 = vpack.c.b16 %v315, %v314
        %v331 = vpack.c.b16 %v317, %v316
        %v332 = vpack.c.b16 %v319, %v318
        %v333 = vpack.c.b16 %v321, %v320
        %v334 = vpack.c.b16 %v323, %v322
        %v335 = vpack.c.b16 %v325, %v324
        %v336 = vpack.c.b16 %v327, %v326
        %v337 = vpack.c.b16 %v329, %v328
        %346 = vmatprep.subr.bf16.mxu0 0
        %347 = vmatpush1.bf16.msra.mxu0 %v337
        %348 = vmatprep.subr.bf16.mxu0 0
        %349 = vmatpush1.bf16.msra.mxu0 %v336
        %350 = vmatprep.subr.bf16.mxu0 0
        %351 = vmatpush1.bf16.msra.mxu0 %v335
        %352 = vmatprep.subr.bf16.mxu0 0
        %353 = vmatpush1.bf16.msra.mxu0 %v334
        %354 = vmatprep.subr.bf16.mxu0 0
        %355 = vmatpush1.bf16.msra.mxu0 %v333
        %356 = vmatprep.subr.bf16.mxu0 0
        %357 = vmatpush1.bf16.msra.mxu0 %v332
        %358 = vmatprep.subr.bf16.mxu0 0
        %359 = vmatpush1.bf16.msra.mxu0 %v331
        %360 = vmatprep.subr.bf16.mxu0 0
        %361 = vmatpush1.bf16.msra.mxu0 %v330
        %362 = vmatprep.subr.bf16.mxu0 0
        %363 = vmatpush2.bf16.msra.mxu0 0
        %364 = vmatprep.subr.bf16.mxu0 0
        %365 = vmatpush2.bf16.msra.mxu0 0
        %366 = vmatprep.subr.bf16.mxu0 0
        %367 = vmatpush2.bf16.msra.mxu0 0
        %368 = vmatprep.subr.bf16.mxu0 0
        %369 = vmatpush2.bf16.msra.mxu0 0
        %370 = vmatprep.subr.bf16.mxu0 0
        %371 = vmatpush2.bf16.msra.mxu0 0
        %372 = vmatprep.subr.bf16.mxu0 0
        %373 = vmatpush2.bf16.msra.mxu0 0
        %374 = vmatprep.subr.bf16.mxu0 0
        %375 = vmatpush2.bf16.msra.mxu0 0
        %376 = vmatprep.subr.bf16.mxu0 0
        %377 = vmatpush2.bf16.msra.mxu0 0
        %378 = vmatprep.mubr.bf16.mxu0 0
        %379 = vmatmul.mubr.bf16.gmra.mxu0 %v271
        %v380 = vpop.f32.mrf.mxu0
        %v381 = vadd.f32 %v296, %v380
        %v382 = vpop.f32.mrf.mxu0
        %v383 = vpop.f32.mrf.mxu0
        %v384 = vadd.f32 %v296, %v383
        %v385 = vpop.f32.mrf.mxu0
        %386 = vmatprep.mubr.bf16.mxu0 0
        %387 = vmatmul.mubr.bf16.gmra.mxu0 %v272
        %v388 = vpop.f32.mrf.mxu0
        %v389 = vadd.f32 %v296, %v388
        %v390 = vpop.f32.mrf.mxu0
        %v391 = vpop.f32.mrf.mxu0
        %v392 = vadd.f32 %v296, %v391
        %v393 = vpop.f32.mrf.mxu0
        %394 = vmatprep.mubr.bf16.mxu0 0
        %395 = vmatmul.mubr.bf16.gmra.mxu0 %v273
        %v396 = vpop.f32.mrf.mxu0
        %v397 = vadd.f32 %v296, %v396
        %v398 = vpop.f32.mrf.mxu0
        %v399 = vpop.f32.mrf.mxu0
        %v400 = vadd.f32 %v296, %v399
        %v401 = vpop.f32.mrf.mxu0
        %402 = vmatprep.mubr.bf16.mxu0 0
        %403 = vmatmul.mubr.bf16.gmra.mxu0 %v274
        %v404 = vpop.f32.mrf.mxu0
        %v405 = vadd.f32 %v296, %v404
        %v406 = vpop.f32.mrf.mxu0
        %v407 = vpop.f32.mrf.mxu0
        %v408 = vadd.f32 %v296, %v407
        %v409 = vpop.f32.mrf.mxu0
        %410 = vdwg.mxu0
        %411 = vst [vmem:[%s249] sm:$0xff] %v381
        %412 = vst [vmem:[%s249 + $0x8] sm:$0xff] %v384
        %413 = vst [vmem:[%s249 + $0x10] sm:$0xff] %v389
        %414 = vst [vmem:[%s249 + $0x18] sm:$0xff] %v392
        %415 = vst [vmem:[%s249 + $0x20] sm:$0xff] %v397
        %416 = vst [vmem:[%s249 + $0x28] sm:$0xff] %v400
        %417 = vst [vmem:[%s249 + $0x30] sm:$0xff] %v405
        %418 = vst [vmem:[%s249 + $0x38] sm:$0xff] %v408
        %v419 = vld [vmem:[#allocation8] sm:$0x1]
        %v420 = vadd.f32 %v381, %v384
        %v421 = vadd.f32 %v420, %v389
        %v422 = vadd.f32 %v421, %v392
        %v423 = vadd.f32 %v422, %v397
        %v424 = vadd.f32 %v423, %v400
        %v425 = vadd.f32 %v424, %v405
        %v426 = vadd.f32 %v425, %v408
        %v427 = vrot.slane %v426, 4
        %v428 = vadd.f32 %v426, %v427
        %v429 = vrot.slane %v428, 2
        %v430 = vadd.f32 %v428, %v429
        %v431 = vrot.slane %v430, 1
        %v432 = vadd.f32 %v430, %v431
        %v433 = vadd.f32 %v419, %v432
        %434 = vst [vmem:[#allocation8] sm:$0x1] %v433
        %v435 = vld [vmem:[#allocation10] sm:$0x1]
        %v436 = vmul.f32 %v381, %v381
        %v437 = vmul.f32 %v384, %v384
        %v438 = vmul.f32 %v389, %v389
        %v439 = vmul.f32 %v392, %v392
        %v440 = vmul.f32 %v397, %v397
        %v441 = vmul.f32 %v400, %v400
        %v442 = vmul.f32 %v405, %v405
        %v443 = vmul.f32 %v408, %v408
        %v444 = vadd.f32 %v436, %v437
        %v445 = vadd.f32 %v444, %v438
        %v446 = vadd.f32 %v445, %v439
        %v447 = vadd.f32 %v446, %v440
        %v448 = vadd.f32 %v447, %v441
        %v449 = vadd.f32 %v448, %v442
        %v450 = vadd.f32 %v449, %v443
        %v451 = vrot.slane %v450, 4
        %v452 = vadd.f32 %v450, %v451
        %v453 = vrot.slane %v452, 2
        %v454 = vadd.f32 %v452, %v453
        %v455 = vrot.slane %v454, 1
        %v456 = vadd.f32 %v454, %v455
        %v457 = vadd.f32 %v435, %v456
        %458 = vst [vmem:[#allocation10] sm:$0x1] %v457
        %s459 = sand.u32 %s101, 1
        %s460 = scalar_lea.sflag [#allocation4], %s459
        %s461 = sand.u32 %s101, 1
        %s462 = smul.addr %s461, 64
        %s463 = scalar_lea.vmem [#allocation7], %s462
        // Predicated region
        $region45: #{tpu_custom_call.1} parent=31 // pred_check
          %p464 = pneg %p111
        $region46: #{tpu_custom_call.1} parent=31 // pred_check_branch
          %466 = sbr.rel (%p464) target = $region48
        $region47: #{tpu_custom_call.1} parent=31 // pred_region
          %s467 = smul.u32 8, %s25
          %s469 = ssub.s32 1024, 1024
          %470 = vsyncadd %s460, %s469
          %s471 = smul.addr %s467, 128
          %s472 = scalar_lea.hbm %s3, %s471
          %s473 = sshll.u32 %s463, 4
          %s474 = int_to_ptr.vmem [resolvable:$true] %s473
          %479 = dma.vmem_to_hbm [thread:$0]  %s474, 1024, %s472, %s460, 128, 128, 8
        $region48: #{tpu_custom_call.1} parent=31 // pred_fallthru
          _
        // Predicated region
        $region49: #{tpu_custom_call.1} parent=31 // pred_check
          %p480 = pneg %p132
        $region50: #{tpu_custom_call.1} parent=31 // pred_check_branch
          %482 = sbr.rel (%p480) target = $region52
        $region51: #{tpu_custom_call.1} parent=31 // pred_region
          %s484 = ssub.s32 16, 16
          %485 = vsyncadd [#allocation9], %s484
          %s487 = sshll.u32 [#allocation8], 4
          %s488 = int_to_ptr.vmem [resolvable:$true] %s487
          %490 = dma.vmem_to_hbm [thread:$0]  %s488, 16, %s4, [#allocation9]
        $region52: #{tpu_custom_call.1} parent=31 // pred_fallthru
          _
        // Predicated region
        $region53: #{tpu_custom_call.1} parent=31 // pred_check
          %p491 = pneg %p153
        $region54: #{tpu_custom_call.1} parent=31 // pred_check_branch
          %493 = sbr.rel (%p491) target = $region56
        $region55: #{tpu_custom_call.1} parent=31 // pred_region
          %s495 = ssub.s32 16, 16
          %496 = vsyncadd [#allocation9], %s495
          %s498 = sshll.u32 [#allocation10], 4
          %s499 = int_to_ptr.vmem [resolvable:$true] %s498
          %501 = dma.vmem_to_hbm [thread:$0]  %s499, 16, %s5, [#allocation9]
        $region56: #{tpu_custom_call.1} parent=31 // pred_fallthru
          _
        // Predicated region
        $region57: #{tpu_custom_call.1} parent=31 // pred_check
          %p502 = pneg %p132
        $region58: #{tpu_custom_call.1} parent=31 // pred_check_branch
          %504 = sbr.rel (%p502) target = $region60
        $region59: #{tpu_custom_call.1} parent=31 // pred_region
          %505 = dma.done [#allocation9], 16
        $region60: #{tpu_custom_call.1} parent=31 // pred_fallthru
          _
        // Predicated region
        $region61: #{tpu_custom_call.1} parent=31 // pred_check
          %p506 = pneg %p153
        $region62: #{tpu_custom_call.1} parent=31 // pred_check_branch
          %508 = sbr.rel (%p506) target = $region64
        $region63: #{tpu_custom_call.1} parent=31 // pred_region
          %509 = dma.done [#allocation9], 16
        $region64: #{tpu_custom_call.1} parent=31 // pred_fallthru
          _
      $region32: #{tpu_custom_call.1} parent=5 // pred_fallthru
        _
      %p510 = scmp.le.s32.totalorder 2, %s20
      // Predicated region
      $region65: #{tpu_custom_call.1} parent=5 // pred_check
        %p511 = pneg %p510
      $region66: #{tpu_custom_call.1} parent=5 // pred_check_branch
        %513 = sbr.rel (%p511) target = $region68
      $region67: #{tpu_custom_call.1} parent=5 // pred_region
        %s514 = ssub.s32 %s20, 2
        // Predicated region
        $region69: #{tpu_custom_call.1} parent=67 // pred_check
          %p515 = pneg %p117
        $region70: #{tpu_custom_call.1} parent=67 // pred_check_branch
          %517 = sbr.rel (%p515) target = $region72
        $region71: #{tpu_custom_call.1} parent=67 // pred_region
          %s518 = sand.u32 %s102, 1
          %s519 = scalar_lea.sflag [#allocation4], %s518
          %s520 = sand.u32 %s102, 1
          %s521 = smul.addr %s520, 64
          %s522 = scalar_lea.vmem [#allocation7], %s521
          %523 = dma.done %s519, 1024
        $region72: #{tpu_custom_call.1} parent=67 // pred_fallthru
          _
      $region68: #{tpu_custom_call.1} parent=5 // pred_fallthru
        _
    $region6: #{tpu_custom_call.1} parent=1 // loop_footer
      %s24 = sadd.s32 1, %s20
    $region7: #{tpu_custom_call.1} parent=1 // loop_footer_branch
      %19 = sbr.rel target = $region3
    $region8: #{tpu_custom_call.1} parent=1 // loop_exit
      _
    %524 = vsyncpa [#allocation3], 1
    %s525 = scalar_lea.sflag [#allocation3], 1
    %526 = vsyncpa %s525, 1
    %527 = vsyncpa [#allocation6], 1
    %528 = vsyncpa [#allocation4], 1
    %s529 = scalar_lea.sflag [#allocation4], 1
    %530 = vsyncpa %s529, 1
    %531 = vsyncpa [#allocation9], 1

</llo_original>
